<compile_context>
chip_gen: v7x
topology: tpu7x:2x2x1
jax: 0.10.0
libtpu: 0.0.40
codegen_flags: <defaults>
</compile_context>

<pallas_src>
import jax
import jax.numpy as jnp
from jax import lax
from jax.experimental import pallas as pl
from jax.experimental.pallas import tpu as pltpu


def _im2col_matmul_kernel(a_ref, w_ref, o_ref):
    """One MXU matmul for the whole problem.

    a_ref : (M, K)     im2col patches for all batch samples  (VMEM)
    w_ref : (K, Cout)  flipped / channel-swapped weight      (VMEM)
    o_ref : (M, Cout)  un-padded output slab                 (VMEM)
    """
    o_ref[...] = jnp.dot(
        a_ref[...], w_ref[...], preferred_element_type=jnp.float32
    ).astype(o_ref.dtype)


def conv_transpose2d_pallas(x_nchw, w_iohw, stride=(2, 2), padding=(1, 1),
                            output_padding=(0, 0)):
    """aten.convolution(..., transposed=True, groups=1, bias=None, dilation=1)."""
    n, ci, h, w = x_nchw.shape
    ci_w, co, kh, kw = w_iohw.shape
    assert ci == ci_w, "groups=1 transposed conv requires matching input channels"
    sh, sw = stride
    ph, pw = padding
    oph, opw = output_padding

    oh = (h - 1) * sh - 2 * ph + (kh - 1) + oph + 1
    ow = (w - 1) * sw - 2 * pw + (kw - 1) + opw + 1

    # ---- wrapper-side layout plumbing (plain JAX / XLA, all tiny) ----
    x_nhwc = jnp.transpose(x_nchw, (0, 2, 3, 1))                      # (N, H, W, C)
    # Zero-dilate by the stride (interior padding) and apply the "transposed"
    # edge padding (kh-1-ph each side, + output_padding high) in one lax.pad.
    x_dp = lax.pad(
        x_nhwc, jnp.zeros((), x_nhwc.dtype),
        ((0, 0, 0),
         (kh - 1 - ph, kh - 1 - ph + oph, sh - 1),
         (kw - 1 - pw, kw - 1 - pw + opw, sw - 1),
         (0, 0, 0)))

    # im2col: stride-1 taps of the dilated input; K = KH*KW*Cin (tap-major,
    # Cin-minor) matches the weight reshape below.
    taps = [x_dp[:, dh:dh + oh, dw:dw + ow, :]
            for dh in range(kh) for dw in range(kw)]
    k_dim = kh * kw * ci
    a = jnp.concatenate(taps, axis=-1).reshape(n * oh * ow, k_dim)    # (M, K)

    # Flipped / channel-swapped weight as one MXU-ready RHS (no Cout padding:
    # the kernel output is emitted with last dim = Cout directly).
    w_hwio = jnp.transpose(w_iohw, (2, 3, 0, 1))[::-1, ::-1]          # (KH, KW, Cin, Cout)
    w2d = w_hwio.reshape(k_dim, co)

    m = n * oh * ow

    cost = pl.CostEstimate(
        flops=2 * m * k_dim * co,
        transcendentals=0,
        bytes_accessed=(a.size + w2d.size + m * co) * 4)

    # Single grid step: the whole working set (<30 KB f32) lives in VMEM, all
    # blocks are full-extent.  (On v7x a grid=(2,) tm=200 split could shard the
    # two TensorCores, but at ~0.8 MFLOP the single-step launch is cheaper and
    # portable across v5e/v6e/v7x.)
    out2d = pl.pallas_call(
        _im2col_matmul_kernel,
        out_shape=jax.ShapeDtypeStruct((m, co), x_nchw.dtype),
        grid=(1,),
        in_specs=[
            pl.BlockSpec((m, k_dim), lambda i: (0, 0)),
            pl.BlockSpec((k_dim, co), lambda i: (0, 0)),
        ],
        out_specs=pl.BlockSpec((m, co), lambda i: (0, 0)),
        compiler_params=pltpu.CompilerParams(
            dimension_semantics=("arbitrary",)),
        cost_estimate=cost,
    )(a, w2d)

    # No Cout-padding slice needed anymore; just reshape + return NCHW.
    out_nhwc = out2d.reshape(n, oh, ow, co)
    return jnp.transpose(out_nhwc, (0, 3, 1, 2))


if __name__ == "__main__":
    key = jax.random.PRNGKey(0)
    k_x, k_w = jax.random.split(key)

    # Static shapes from the module annotation.
    x = jax.random.normal(k_x, (5, 2, 5, 6), dtype=jnp.float32)   # NCHW input
    w = jax.random.normal(k_w, (2, 5, 2, 2), dtype=jnp.float32)   # (Cin, Cout, KH, KW)

    out = conv_transpose2d_pallas(x, w, stride=(2, 2), padding=(1, 1),
                                  output_padding=(0, 0))
    out = jax.block_until_ready(out)

    # Reference: XLA transposed conv with PyTorch ConvTranspose2d semantics
    # (channel-swapped, spatially-flipped kernel + lhs_dilation).
    kh, kw, ph, pw, sh, sw = 2, 2, 1, 1, 2, 2
    w_oihw_flipped = jnp.transpose(w, (1, 0, 2, 3))[:, :, ::-1, ::-1]
    ref = lax.conv_general_dilated(
        x, w_oihw_flipped,
        window_strides=(1, 1),
        padding=((kh - 1 - ph, kh - 1 - ph), (kw - 1 - pw, kw - 1 - pw)),
        lhs_dilation=(sh, sw),
        rhs_dilation=(1, 1),
        dimension_numbers=("NCHW", "OIHW", "NCHW"),
    )
    assert out.shape == ref.shape == (5, 5, 8, 10), (out.shape, ref.shape)
    assert jnp.allclose(out, ref, atol=1e-4, rtol=1e-4), \
        float(jnp.max(jnp.abs(out - ref)))

    print("KERNEL_OK")
</pallas_src>

<mosaic_0001>
module attributes {stable_mosaic.version = 11 : i64} {
  func.func @_im2col_matmul_kernel(%arg0: i32, %arg1: memref<400x8xf32, #tpu.memory_space<vmem>>, %arg2: memref<8x5xf32, #tpu.memory_space<vmem>>, %arg3: memref<400x5xf32, #tpu.memory_space<vmem>>) attributes {dimension_semantics = [#tpu.dimension_semantics<arbitrary>], iteration_bounds = array<i64: 1>, scalar_prefetch = 0 : i64, scratch_operands = 0 : i64, tpu.core_type = #tpu.core_type<tc>, window_params = [{pipeline_mode = #tpu.pipeline_mode<synchronous>, transform_indices = @transform_0, window_bounds = array<i64: 400, 8>}, {pipeline_mode = #tpu.pipeline_mode<synchronous>, transform_indices = @transform_1, window_bounds = array<i64: 8, 5>}, {pipeline_mode = #tpu.pipeline_mode<synchronous>, transform_indices = @transform_2, window_bounds = array<i64: 400, 5>}]} {
    %c0 = arith.constant 0 : index
    %c0_0 = arith.constant 0 : index
    %0 = vector.load %arg1[%c0, %c0_0] : memref<400x8xf32, #tpu.memory_space<vmem>>, vector<400x8xf32>
    %c0_1 = arith.constant 0 : index
    %c0_2 = arith.constant 0 : index
    %1 = vector.load %arg2[%c0_1, %c0_2] : memref<8x5xf32, #tpu.memory_space<vmem>>, vector<8x5xf32>
    %cst = arith.constant dense<0.000000e+00> : vector<400x5xf32>
    %2 = tpu.matmul %0, %1, %cst {dimension_numbers = #tpu.dot_dimension_numbers<[1], [0], [0], [1], [0, 0, 1, 1], [], []>} : vector<400x8xf32>, vector<8x5xf32>, vector<400x5xf32> -> vector<400x5xf32>
    %c0_3 = arith.constant 0 : index
    %c0_4 = arith.constant 0 : index
    %3 = vector.load %arg3[%c0_3, %c0_4] : memref<400x5xf32, #tpu.memory_space<vmem>>, vector<400x5xf32>
    tpu.vector_store %arg3[%c0_3, %c0_4], %2 {strides = array<i32>} : memref<400x5xf32, #tpu.memory_space<vmem>>, vector<400x5xf32>,
    return
  }
  func.func @transform_0(%arg0: i32) -> (i32, i32) {
    %c0_i32 = arith.constant 0 : i32
    %c0_i32_0 = arith.constant 0 : i32
    %c0_i32_1 = arith.constant 0 : i32
    return %c0_i32, %c0_i32_0 : i32, i32
  }
  func.func @transform_1(%arg0: i32) -> (i32, i32) {
    %c0_i32 = arith.constant 0 : i32
    %c0_i32_0 = arith.constant 0 : i32
    %c0_i32_1 = arith.constant 0 : i32
    return %c0_i32, %c0_i32_0 : i32, i32
  }
  func.func @transform_2(%arg0: i32) -> (i32, i32) {
    %c0_i32 = arith.constant 0 : i32
    %c0_i32_0 = arith.constant 0 : i32
    %c0_i32_1 = arith.constant 0 : i32
    return %c0_i32, %c0_i32_0 : i32, i32
  }
}

</mosaic_0001>

<llo_original>
// kernel: tpu_custom_call.1
$region0: #{tpu_custom_call.1}
  #allocation0 [shape = 'u32[]', space=smem, size = 0x4, offset = 0x4, fixed_abs, tag = 'smem constant byte address 0x4 - core index']
  #allocation1 [shape = 'u32[144,128]{1,0:T(1,128)}', space=vmem, size = 0x12000, scoped, tag = 'internal scratch']
  %s0 = inlined_call_operand.vmem [shape: f32[400,8], index: 0, kind: input, shape index: {}]
  %s1 = inlined_call_operand.vmem [shape: f32[8,5], index: 1, kind: input, shape index: {}]
  %s2 = inlined_call_operand.vmem [shape: f32[400,5], index: 2, kind: output, shape index: {}]
  %s3 = sld [smem:[#allocation0]]
  $region18: #{tpu_custom_call.1} parent=0
    _
  %s5 = ssub.s32 1, %s3
  %s6 = scalar_select 0, %s5, %s3
  // Predicated region
  $region2: #{tpu_custom_call.1} parent=0 // pred_check
    _
  $region3: #{tpu_custom_call.1} parent=0 // pred_check_branch
    %8 = sbr.rel (0) target = $region5
  $region4: #{tpu_custom_call.1} parent=0 // pred_region
    _
  $region5: #{tpu_custom_call.1} parent=0 // pred_fallthru
    _
  // Predicated region
  $region6: #{tpu_custom_call.1} parent=0 // pred_check
    _
  $region7: #{tpu_custom_call.1} parent=0 // pred_check_branch
    %10 = sbr.rel (0) target = $region9
  $region8: #{tpu_custom_call.1} parent=0 // pred_region
    _
  $region9: #{tpu_custom_call.1} parent=0 // pred_fallthru
    _
  %v11 = vld [vmem:[%s0] sm:$0xff]
  %v12 = vld [vmem:[%s0 + $0x8] sm:$0xff]
  %v13 = vld [vmem:[%s0 + $0x10] sm:$0xff]
  %v14 = vld [vmem:[%s0 + $0x18] sm:$0xff]
  %v15 = vld [vmem:[%s0 + $0x20] sm:$0xff]
  %v16 = vld [vmem:[%s0 + $0x28] sm:$0xff]
  %v17 = vld [vmem:[%s0 + $0x30] sm:$0xff]
  %v18 = vld [vmem:[%s0 + $0x38] sm:$0xff]
  %v19 = vld [vmem:[%s0 + $0x40] sm:$0xff]
  %v20 = vld [vmem:[%s0 + $0x48] sm:$0xff]
  %v21 = vld [vmem:[%s0 + $0x50] sm:$0xff]
  %v22 = vld [vmem:[%s0 + $0x58] sm:$0xff]
  %v23 = vld [vmem:[%s0 + $0x60] sm:$0xff]
  %v24 = vld [vmem:[%s0 + $0x68] sm:$0xff]
  %v25 = vld [vmem:[%s0 + $0x70] sm:$0xff]
  %v26 = vld [vmem:[%s0 + $0x78] sm:$0xff]
  %v27 = vld [vmem:[%s0 + $0x80] sm:$0xff]
  %v28 = vld [vmem:[%s0 + $0x88] sm:$0xff]
  %v29 = vld [vmem:[%s0 + $0x90] sm:$0xff]
  %v30 = vld [vmem:[%s0 + $0x98] sm:$0xff]
  %v31 = vld [vmem:[%s0 + $0xa0] sm:$0xff]
  %v32 = vld [vmem:[%s0 + $0xa8] sm:$0xff]
  %v33 = vld [vmem:[%s0 + $0xb0] sm:$0xff]
  %v34 = vld [vmem:[%s0 + $0xb8] sm:$0xff]
  %v35 = vld [vmem:[%s0 + $0xc0] sm:$0xff]
  %v36 = vld [vmem:[%s0 + $0xc8] sm:$0xff]
  %v37 = vld [vmem:[%s0 + $0xd0] sm:$0xff]
  %v38 = vld [vmem:[%s0 + $0xd8] sm:$0xff]
  %v39 = vld [vmem:[%s0 + $0xe0] sm:$0xff]
  %v40 = vld [vmem:[%s0 + $0xe8] sm:$0xff]
  %v41 = vld [vmem:[%s0 + $0xf0] sm:$0xff]
  %v42 = vld [vmem:[%s0 + $0xf8] sm:$0xff]
  %v43 = vld [vmem:[%s0 + $0x100] sm:$0xff]
  %v44 = vld [vmem:[%s0 + $0x108] sm:$0xff]
  %v45 = vld [vmem:[%s0 + $0x110] sm:$0xff]
  %v46 = vld [vmem:[%s0 + $0x118] sm:$0xff]
  %v47 = vld [vmem:[%s0 + $0x120] sm:$0xff]
  %v48 = vld [vmem:[%s0 + $0x128] sm:$0xff]
  %v49 = vld [vmem:[%s0 + $0x130] sm:$0xff]
  %v50 = vld [vmem:[%s0 + $0x138] sm:$0xff]
  %v51 = vld [vmem:[%s0 + $0x140] sm:$0xff]
  %v52 = vld [vmem:[%s0 + $0x148] sm:$0xff]
  %v53 = vld [vmem:[%s0 + $0x150] sm:$0xff]
  %v54 = vld [vmem:[%s0 + $0x158] sm:$0xff]
  %v55 = vld [vmem:[%s0 + $0x160] sm:$0xff]
  %v56 = vld [vmem:[%s0 + $0x168] sm:$0xff]
  %v57 = vld [vmem:[%s0 + $0x170] sm:$0xff]
  %v58 = vld [vmem:[%s0 + $0x178] sm:$0xff]
  %v59 = vld [vmem:[%s0 + $0x180] sm:$0xff]
  %v60 = vld [vmem:[%s0 + $0x188] sm:$0xff]
  %v61 = vld [vmem:[%s1] sm:$0xff]
  %vm62 = vcmask 64512
  %v64 = vsel %vm62, %v11, 0
  %v67 = vsel %vm62, %v12, 0
  %v70 = vsel %vm62, %v13, 0
  %v73 = vsel %vm62, %v14, 0
  %v76 = vsel %vm62, %v15, 0
  %v79 = vsel %vm62, %v16, 0
  %v82 = vsel %vm62, %v17, 0
  %v85 = vsel %vm62, %v18, 0
  %v88 = vsel %vm62, %v19, 0
  %v91 = vsel %vm62, %v20, 0
  %v94 = vsel %vm62, %v21, 0
  %v97 = vsel %vm62, %v22, 0
  %v100 = vsel %vm62, %v23, 0
  %v103 = vsel %vm62, %v24, 0
  %v106 = vsel %vm62, %v25, 0
  %v109 = vsel %vm62, %v26, 0
  %v112 = vsel %vm62, %v27, 0
  %v115 = vsel %vm62, %v28, 0
  %v118 = vsel %vm62, %v29, 0
  %v121 = vsel %vm62, %v30, 0
  %v124 = vsel %vm62, %v31, 0
  %v127 = vsel %vm62, %v32, 0
  %v130 = vsel %vm62, %v33, 0
  %v133 = vsel %vm62, %v34, 0
  %v136 = vsel %vm62, %v35, 0
  %v139 = vsel %vm62, %v36, 0
  %v142 = vsel %vm62, %v37, 0
  %v145 = vsel %vm62, %v38, 0
  %v148 = vsel %vm62, %v39, 0
  %v151 = vsel %vm62, %v40, 0
  %v154 = vsel %vm62, %v41, 0
  %v157 = vsel %vm62, %v42, 0
  %v160 = vsel %vm62, %v43, 0
  %v163 = vsel %vm62, %v44, 0
  %v166 = vsel %vm62, %v45, 0
  %v169 = vsel %vm62, %v46, 0
  %v172 = vsel %vm62, %v47, 0
  %v175 = vsel %vm62, %v48, 0
  %v178 = vsel %vm62, %v49, 0
  %v181 = vsel %vm62, %v50, 0
  %v184 = vsel %vm62, %v51, 0
  %v187 = vsel %vm62, %v52, 0
  %v190 = vsel %vm62, %v53, 0
  %v193 = vsel %vm62, %v54, 0
  %v196 = vsel %vm62, %v55, 0
  %v199 = vsel %vm62, %v56, 0
  %v202 = vsel %vm62, %v57, 0
  %v205 = vsel %vm62, %v58, 0
  %v208 = vsel %vm62, %v59, 0
  %v211 = vsel %vm62, %v60, 0
  %213 = vmatprep.subr.mxu0 0.0
  %214 = vmatpush1.msra.mxu0 %v61
  %215 = vmatprep.subr.mxu0 0.0
  %216 = vmatpush1.msra.mxu0 0.0
  %217 = vmatprep.subr.mxu0 0.0
  %218 = vmatpush1.msra.mxu0 0.0
  %219 = vmatprep.subr.mxu0 0.0
  %220 = vmatpush1.msra.mxu0 0.0
  %221 = vmatprep.subr.mxu0 0.0
  %222 = vmatpush1.msra.mxu0 0.0
  %223 = vmatprep.subr.mxu0 0.0
  %224 = vmatpush1.msra.mxu0 0.0
  %225 = vmatprep.subr.mxu0 0.0
  %226 = vmatpush1.msra.mxu0 0.0
  %227 = vmatprep.subr.mxu0 0.0
  %228 = vmatpush1.msra.mxu0 0.0
  %229 = vmatprep.subr.mxu0 0.0
  %230 = vmatpush1.msra.mxu0 0.0
  %231 = vmatprep.subr.mxu0 0.0
  %232 = vmatpush1.msra.mxu0 0.0
  %233 = vmatprep.subr.mxu0 0.0
  %234 = vmatpush1.msra.mxu0 0.0
  %235 = vmatprep.subr.mxu0 0.0
  %236 = vmatpush1.msra.mxu0 0.0
  %237 = vmatprep.subr.mxu0 0.0
  %238 = vmatpush1.msra.mxu0 0.0
  %239 = vmatprep.subr.mxu0 0.0
  %240 = vmatpush1.msra.mxu0 0.0
  %241 = vmatprep.subr.mxu0 0.0
  %242 = vmatpush1.msra.mxu0 0.0
  %243 = vmatprep.subr.mxu0 0.0
  %244 = vmatpush1.msra.mxu0 0.0
  %245 = vmatprep.subr.mxu0 0.0
  %246 = vmatpush1.msra.mxu0 0.0
  %247 = vmatprep.subr.mxu0 0.0
  %248 = vmatpush1.msra.mxu0 0.0
  %249 = vmatprep.subr.mxu0 0.0
  %250 = vmatpush1.msra.mxu0 0.0
  %251 = vmatprep.subr.mxu0 0.0
  %252 = vmatpush1.msra.mxu0 0.0
  %253 = vmatprep.subr.mxu0 0.0
  %254 = vmatpush1.msra.mxu0 0.0
  %255 = vmatprep.subr.mxu0 0.0
  %256 = vmatpush1.msra.mxu0 0.0
  %257 = vmatprep.subr.mxu0 0.0
  %258 = vmatpush1.msra.mxu0 0.0
  %259 = vmatprep.subr.mxu0 0.0
  %260 = vmatpush1.msra.mxu0 0.0
  %261 = vmatprep.subr.mxu0 0.0
  %262 = vmatpush1.msra.mxu0 0.0
  %263 = vmatprep.subr.mxu0 0.0
  %264 = vmatpush1.msra.mxu0 0.0
  %265 = vmatprep.subr.mxu0 0.0
  %266 = vmatpush1.msra.mxu0 0.0
  %267 = vmatprep.subr.mxu0 0.0
  %268 = vmatpush1.msra.mxu0 0.0
  %269 = vmatprep.subr.mxu0 0.0
  %270 = vmatpush1.msra.mxu0 0.0
  %271 = vmatprep.subr.mxu0 0.0
  %272 = vmatpush1.msra.mxu0 0.0
  %273 = vmatprep.subr.mxu0 0.0
  %274 = vmatpush1.msra.mxu0 0.0
  %275 = vmatprep.subr.mxu0 0.0
  %276 = vmatpush1.msra.mxu0 0.0
  %277 = vmatprep.mubr.f32.mxu0 0.0
  %278 = vmatmul.mubr.f32.gmra.mrb[0].mxu0 %v64
  %v279 = vpop.f32.mrb[0].mxu0
  %v280 = vadd.f32 0.0, %v279
  %v281 = vpop.f32.mrb[0].mxu0
  %282 = vmatprep.mubr.f32.mxu0 0.0
  %283 = vmatmul.mubr.f32.gmra.mrb[0].mxu0 %v67
  %v284 = vpop.f32.mrb[0].mxu0
  %v285 = vadd.f32 0.0, %v284
  %v286 = vpop.f32.mrb[0].mxu0
  %287 = vmatprep.mubr.f32.mxu0 0.0
  %288 = vmatmul.mubr.f32.gmra.mrb[0].mxu0 %v70
  %v289 = vpop.f32.mrb[0].mxu0
  %v290 = vadd.f32 0.0, %v289
  %v291 = vpop.f32.mrb[0].mxu0
  %292 = vmatprep.mubr.f32.mxu0 0.0
  %293 = vmatmul.mubr.f32.gmra.mrb[0].mxu0 %v73
  %v294 = vpop.f32.mrb[0].mxu0
  %v295 = vadd.f32 0.0, %v294
  %v296 = vpop.f32.mrb[0].mxu0
  %297 = vmatprep.mubr.f32.mxu0 0.0
  %298 = vmatmul.mubr.f32.gmra.mrb[0].mxu0 %v76
  %v299 = vpop.f32.mrb[0].mxu0
  %v300 = vadd.f32 0.0, %v299
  %v301 = vpop.f32.mrb[0].mxu0
  %302 = vmatprep.mubr.f32.mxu0 0.0
  %303 = vmatmul.mubr.f32.gmra.mrb[0].mxu0 %v79
  %v304 = vpop.f32.mrb[0].mxu0
  %v305 = vadd.f32 0.0, %v304
  %v306 = vpop.f32.mrb[0].mxu0
  %307 = vmatprep.mubr.f32.mxu0 0.0
  %308 = vmatmul.mubr.f32.gmra.mrb[0].mxu0 %v82
  %v309 = vpop.f32.mrb[0].mxu0
  %v310 = vadd.f32 0.0, %v309
  %v311 = vpop.f32.mrb[0].mxu0
  %312 = vmatprep.mubr.f32.mxu0 0.0
  %313 = vmatmul.mubr.f32.gmra.mrb[0].mxu0 %v85
  %v314 = vpop.f32.mrb[0].mxu0
  %v315 = vadd.f32 0.0, %v314
  %v316 = vpop.f32.mrb[0].mxu0
  %317 = vmatprep.mubr.f32.mxu0 0.0
  %318 = vmatmul.mubr.f32.gmra.mrb[0].mxu0 %v88
  %v319 = vpop.f32.mrb[0].mxu0
  %v320 = vadd.f32 0.0, %v319
  %v321 = vpop.f32.mrb[0].mxu0
  %322 = vmatprep.mubr.f32.mxu0 0.0
  %323 = vmatmul.mubr.f32.gmra.mrb[0].mxu0 %v91
  %v324 = vpop.f32.mrb[0].mxu0
  %v325 = vadd.f32 0.0, %v324
  %v326 = vpop.f32.mrb[0].mxu0
  %327 = vmatprep.mubr.f32.mxu0 0.0
  %328 = vmatmul.mubr.f32.gmra.mrb[0].mxu0 %v94
  %v329 = vpop.f32.mrb[0].mxu0
  %v330 = vadd.f32 0.0, %v329
  %v331 = vpop.f32.mrb[0].mxu0
  %332 = vmatprep.mubr.f32.mxu0 0.0
  %333 = vmatmul.mubr.f32.gmra.mrb[0].mxu0 %v97
  %v334 = vpop.f32.mrb[0].mxu0
  %v335 = vadd.f32 0.0, %v334
  %v336 = vpop.f32.mrb[0].mxu0
  %337 = vmatprep.mubr.f32.mxu0 0.0
  %338 = vmatmul.mubr.f32.gmra.mrb[0].mxu0 %v100
  %v339 = vpop.f32.mrb[0].mxu0
  %v340 = vadd.f32 0.0, %v339
  %v341 = vpop.f32.mrb[0].mxu0
  %342 = vmatprep.mubr.f32.mxu0 0.0
  %343 = vmatmul.mubr.f32.gmra.mrb[0].mxu0 %v103
  %v344 = vpop.f32.mrb[0].mxu0
  %v345 = vadd.f32 0.0, %v344
  %v346 = vpop.f32.mrb[0].mxu0
  %347 = vmatprep.mubr.f32.mxu0 0.0
  %348 = vmatmul.mubr.f32.gmra.mrb[0].mxu0 %v106
  %v349 = vpop.f32.mrb[0].mxu0
  %v350 = vadd.f32 0.0, %v349
  %v351 = vpop.f32.mrb[0].mxu0
  %352 = vmatprep.mubr.f32.mxu0 0.0
  %353 = vmatmul.mubr.f32.gmra.mrb[0].mxu0 %v109
  %v354 = vpop.f32.mrb[0].mxu0
  %v355 = vadd.f32 0.0, %v354
  %v356 = vpop.f32.mrb[0].mxu0
  %357 = vmatprep.mubr.f32.mxu0 0.0
  %358 = vmatmul.mubr.f32.gmra.mrb[0].mxu0 %v112
  %v359 = vpop.f32.mrb[0].mxu0
  %v360 = vadd.f32 0.0, %v359
  %v361 = vpop.f32.mrb[0].mxu0
  %362 = vmatprep.mubr.f32.mxu0 0.0
  %363 = vmatmul.mubr.f32.gmra.mrb[0].mxu0 %v115
  %v364 = vpop.f32.mrb[0].mxu0
  %v365 = vadd.f32 0.0, %v364
  %v366 = vpop.f32.mrb[0].mxu0
  %367 = vmatprep.mubr.f32.mxu0 0.0
  %368 = vmatmul.mubr.f32.gmra.mrb[0].mxu0 %v118
  %v369 = vpop.f32.mrb[0].mxu0
  %v370 = vadd.f32 0.0, %v369
  %v371 = vpop.f32.mrb[0].mxu0
  %372 = vmatprep.mubr.f32.mxu0 0.0
  %373 = vmatmul.mubr.f32.gmra.mrb[0].mxu0 %v121
  %v374 = vpop.f32.mrb[0].mxu0
  %v375 = vadd.f32 0.0, %v374
  %v376 = vpop.f32.mrb[0].mxu0
  %377 = vmatprep.mubr.f32.mxu0 0.0
  %378 = vmatmul.mubr.f32.gmra.mrb[0].mxu0 %v124
  %v379 = vpop.f32.mrb[0].mxu0
  %v380 = vadd.f32 0.0, %v379
  %v381 = vpop.f32.mrb[0].mxu0
  %382 = vmatprep.mubr.f32.mxu0 0.0
  %383 = vmatmul.mubr.f32.gmra.mrb[0].mxu0 %v127
  %v384 = vpop.f32.mrb[0].mxu0
  %v385 = vadd.f32 0.0, %v384
  %v386 = vpop.f32.mrb[0].mxu0
  %387 = vmatprep.mubr.f32.mxu0 0.0
  %388 = vmatmul.mubr.f32.gmra.mrb[0].mxu0 %v130
  %v389 = vpop.f32.mrb[0].mxu0
  %v390 = vadd.f32 0.0, %v389
  %v391 = vpop.f32.mrb[0].mxu0
  %392 = vmatprep.mubr.f32.mxu0 0.0
  %393 = vmatmul.mubr.f32.gmra.mrb[0].mxu0 %v133
  %v394 = vpop.f32.mrb[0].mxu0
  %v395 = vadd.f32 0.0, %v394
  %v396 = vpop.f32.mrb[0].mxu0
  %397 = vmatprep.mubr.f32.mxu0 0.0
  %398 = vmatmul.mubr.f32.gmra.mrb[0].mxu0 %v136
  %v399 = vpop.f32.mrb[0].mxu0
  %v400 = vadd.f32 0.0, %v399
  %v401 = vpop.f32.mrb[0].mxu0
  %402 = vmatprep.mubr.f32.mxu0 0.0
  %403 = vmatmul.mubr.f32.gmra.mrb[0].mxu0 %v139
  %v404 = vpop.f32.mrb[0].mxu0
  %v405 = vadd.f32 0.0, %v404
  %v406 = vpop.f32.mrb[0].mxu0
  %407 = vmatprep.mubr.f32.mxu0 0.0
  %408 = vmatmul.mubr.f32.gmra.mrb[0].mxu0 %v142
  %v409 = vpop.f32.mrb[0].mxu0
  %v410 = vadd.f32 0.0, %v409
  %v411 = vpop.f32.mrb[0].mxu0
  %412 = vmatprep.mubr.f32.mxu0 0.0
  %413 = vmatmul.mubr.f32.gmra.mrb[0].mxu0 %v145
  %v414 = vpop.f32.mrb[0].mxu0
  %v415 = vadd.f32 0.0, %v414
  %v416 = vpop.f32.mrb[0].mxu0
  %417 = vmatprep.mubr.f32.mxu0 0.0
  %418 = vmatmul.mubr.f32.gmra.mrb[0].mxu0 %v148
  %v419 = vpop.f32.mrb[0].mxu0
  %v420 = vadd.f32 0.0, %v419
  %v421 = vpop.f32.mrb[0].mxu0
  %422 = vmatprep.mubr.f32.mxu0 0.0
  %423 = vmatmul.mubr.f32.gmra.mrb[0].mxu0 %v151
  %v424 = vpop.f32.mrb[0].mxu0
  %v425 = vadd.f32 0.0, %v424
  %v426 = vpop.f32.mrb[0].mxu0
  %427 = vmatprep.mubr.f32.mxu0 0.0
  %428 = vmatmul.mubr.f32.gmra.mrb[0].mxu0 %v154
  %v429 = vpop.f32.mrb[0].mxu0
  %v430 = vadd.f32 0.0, %v429
  %v431 = vpop.f32.mrb[0].mxu0
  %432 = vmatprep.mubr.f32.mxu0 0.0
  %433 = vmatmul.mubr.f32.gmra.mrb[0].mxu0 %v157
  %v434 = vpop.f32.mrb[0].mxu0
  %v435 = vadd.f32 0.0, %v434
  %v436 = vpop.f32.mrb[0].mxu0
  %437 = vmatprep.mubr.f32.mxu0 0.0
  %438 = vmatmul.mubr.f32.gmra.mrb[0].mxu0 %v160
  %v439 = vpop.f32.mrb[0].mxu0
  %v440 = vadd.f32 0.0, %v439
  %v441 = vpop.f32.mrb[0].mxu0
  %442 = vmatprep.mubr.f32.mxu0 0.0
  %443 = vmatmul.mubr.f32.gmra.mrb[0].mxu0 %v163
  %v444 = vpop.f32.mrb[0].mxu0
  %v445 = vadd.f32 0.0, %v444
  %v446 = vpop.f32.mrb[0].mxu0
  %447 = vmatprep.mubr.f32.mxu0 0.0
  %448 = vmatmul.mubr.f32.gmra.mrb[0].mxu0 %v166
  %v449 = vpop.f32.mrb[0].mxu0
  %v450 = vadd.f32 0.0, %v449
  %v451 = vpop.f32.mrb[0].mxu0
  %452 = vmatprep.mubr.f32.mxu0 0.0
  %453 = vmatmul.mubr.f32.gmra.mrb[0].mxu0 %v169
  %v454 = vpop.f32.mrb[0].mxu0
  %v455 = vadd.f32 0.0, %v454
  %v456 = vpop.f32.mrb[0].mxu0
  %457 = vmatprep.mubr.f32.mxu0 0.0
  %458 = vmatmul.mubr.f32.gmra.mrb[0].mxu0 %v172
  %v459 = vpop.f32.mrb[0].mxu0
  %v460 = vadd.f32 0.0, %v459
  %v461 = vpop.f32.mrb[0].mxu0
  %462 = vmatprep.mubr.f32.mxu0 0.0
  %463 = vmatmul.mubr.f32.gmra.mrb[0].mxu0 %v175
  %v464 = vpop.f32.mrb[0].mxu0
  %v465 = vadd.f32 0.0, %v464
  %v466 = vpop.f32.mrb[0].mxu0
  %467 = vmatprep.mubr.f32.mxu0 0.0
  %468 = vmatmul.mubr.f32.gmra.mrb[0].mxu0 %v178
  %v469 = vpop.f32.mrb[0].mxu0
  %v470 = vadd.f32 0.0, %v469
  %v471 = vpop.f32.mrb[0].mxu0
  %472 = vmatprep.mubr.f32.mxu0 0.0
  %473 = vmatmul.mubr.f32.gmra.mrb[0].mxu0 %v181
  %v474 = vpop.f32.mrb[0].mxu0
  %v475 = vadd.f32 0.0, %v474
  %v476 = vpop.f32.mrb[0].mxu0
  %477 = vmatprep.mubr.f32.mxu0 0.0
  %478 = vmatmul.mubr.f32.gmra.mrb[0].mxu0 %v184
  %v479 = vpop.f32.mrb[0].mxu0
  %v480 = vadd.f32 0.0, %v479
  %v481 = vpop.f32.mrb[0].mxu0
  %482 = vmatprep.mubr.f32.mxu0 0.0
  %483 = vmatmul.mubr.f32.gmra.mrb[0].mxu0 %v187
  %v484 = vpop.f32.mrb[0].mxu0
  %v485 = vadd.f32 0.0, %v484
  %v486 = vpop.f32.mrb[0].mxu0
  %487 = vmatprep.mubr.f32.mxu0 0.0
  %488 = vmatmul.mubr.f32.gmra.mrb[0].mxu0 %v190
  %v489 = vpop.f32.mrb[0].mxu0
  %v490 = vadd.f32 0.0, %v489
  %v491 = vpop.f32.mrb[0].mxu0
  %492 = vmatprep.mubr.f32.mxu0 0.0
  %493 = vmatmul.mubr.f32.gmra.mrb[0].mxu0 %v193
  %v494 = vpop.f32.mrb[0].mxu0
  %v495 = vadd.f32 0.0, %v494
  %v496 = vpop.f32.mrb[0].mxu0
  %497 = vmatprep.mubr.f32.mxu0 0.0
  %498 = vmatmul.mubr.f32.gmra.mrb[0].mxu0 %v196
  %v499 = vpop.f32.mrb[0].mxu0
  %v500 = vadd.f32 0.0, %v499
  %v501 = vpop.f32.mrb[0].mxu0
  %502 = vmatprep.mubr.f32.mxu0 0.0
  %503 = vmatmul.mubr.f32.gmra.mrb[0].mxu0 %v199
  %v504 = vpop.f32.mrb[0].mxu0
  %v505 = vadd.f32 0.0, %v504
  %v506 = vpop.f32.mrb[0].mxu0
  %507 = vmatprep.mubr.f32.mxu0 0.0
  %508 = vmatmul.mubr.f32.gmra.mrb[0].mxu0 %v202
  %v509 = vpop.f32.mrb[0].mxu0
  %v510 = vadd.f32 0.0, %v509
  %v511 = vpop.f32.mrb[0].mxu0
  %512 = vmatprep.mubr.f32.mxu0 0.0
  %513 = vmatmul.mubr.f32.gmra.mrb[0].mxu0 %v205
  %v514 = vpop.f32.mrb[0].mxu0
  %v515 = vadd.f32 0.0, %v514
  %v516 = vpop.f32.mrb[0].mxu0
  %517 = vmatprep.mubr.f32.mxu0 0.0
  %518 = vmatmul.mubr.f32.gmra.mrb[0].mxu0 %v208
  %v519 = vpop.f32.mrb[0].mxu0
  %v520 = vadd.f32 0.0, %v519
  %v521 = vpop.f32.mrb[0].mxu0
  %522 = vmatprep.mubr.f32.mxu0 0.0
  %523 = vmatmul.mubr.f32.gmra.mrb[0].mxu0 %v211
  %v524 = vpop.f32.mrb[0].mxu0
  %v525 = vadd.f32 0.0, %v524
  %v526 = vpop.f32.mrb[0].mxu0
  %527 = vdwg.mxu0
  %vm528 = vcmask 39936
  %529 = vst.msk [vmem:[%s2] sm:$0xff] %vm528, %v280
  %530 = vst.msk [vmem:[%s2 + $0x8] sm:$0xff] %vm528, %v285
  %531 = vst.msk [vmem:[%s2 + $0x10] sm:$0xff] %vm528, %v290
  %532 = vst.msk [vmem:[%s2 + $0x18] sm:$0xff] %vm528, %v295
  %533 = vst.msk [vmem:[%s2 + $0x20] sm:$0xff] %vm528, %v300
  %534 = vst.msk [vmem:[%s2 + $0x28] sm:$0xff] %vm528, %v305
  %535 = vst.msk [vmem:[%s2 + $0x30] sm:$0xff] %vm528, %v310
  %536 = vst.msk [vmem:[%s2 + $0x38] sm:$0xff] %vm528, %v315
  %537 = vst.msk [vmem:[%s2 + $0x40] sm:$0xff] %vm528, %v320
  %538 = vst.msk [vmem:[%s2 + $0x48] sm:$0xff] %vm528, %v325
  %539 = vst.msk [vmem:[%s2 + $0x50] sm:$0xff] %vm528, %v330
  %540 = vst.msk [vmem:[%s2 + $0x58] sm:$0xff] %vm528, %v335
  %541 = vst.msk [vmem:[%s2 + $0x60] sm:$0xff] %vm528, %v340
  %542 = vst.msk [vmem:[%s2 + $0x68] sm:$0xff] %vm528, %v345
  %543 = vst.msk [vmem:[%s2 + $0x70] sm:$0xff] %vm528, %v350
  %544 = vst.msk [vmem:[%s2 + $0x78] sm:$0xff] %vm528, %v355
  %545 = vst.msk [vmem:[%s2 + $0x80] sm:$0xff] %vm528, %v360
  %546 = vst.msk [vmem:[%s2 + $0x88] sm:$0xff] %vm528, %v365
  %547 = vst.msk [vmem:[%s2 + $0x90] sm:$0xff] %vm528, %v370
  %548 = vst.msk [vmem:[%s2 + $0x98] sm:$0xff] %vm528, %v375
  %549 = vst.msk [vmem:[%s2 + $0xa0] sm:$0xff] %vm528, %v380
  %550 = vst.msk [vmem:[%s2 + $0xa8] sm:$0xff] %vm528, %v385
  %551 = vst.msk [vmem:[%s2 + $0xb0] sm:$0xff] %vm528, %v390
  %552 = vst.msk [vmem:[%s2 + $0xb8] sm:$0xff] %vm528, %v395
  %553 = vst.msk [vmem:[%s2 + $0xc0] sm:$0xff] %vm528, %v400
  %554 = vst.msk [vmem:[%s2 + $0xc8] sm:$0xff] %vm528, %v405
  %555 = vst.msk [vmem:[%s2 + $0xd0] sm:$0xff] %vm528, %v410
  %556 = vst.msk [vmem:[%s2 + $0xd8] sm:$0xff] %vm528, %v415
  %557 = vst.msk [vmem:[%s2 + $0xe0] sm:$0xff] %vm528, %v420
  %558 = vst.msk [vmem:[%s2 + $0xe8] sm:$0xff] %vm528, %v425
  %559 = vst.msk [vmem:[%s2 + $0xf0] sm:$0xff] %vm528, %v430
  %560 = vst.msk [vmem:[%s2 + $0xf8] sm:$0xff] %vm528, %v435
  %561 = vst.msk [vmem:[%s2 + $0x100] sm:$0xff] %vm528, %v440
  %562 = vst.msk [vmem:[%s2 + $0x108] sm:$0xff] %vm528, %v445
  %563 = vst.msk [vmem:[%s2 + $0x110] sm:$0xff] %vm528, %v450
  %564 = vst.msk [vmem:[%s2 + $0x118] sm:$0xff] %vm528, %v455
  %565 = vst.msk [vmem:[%s2 + $0x120] sm:$0xff] %vm528, %v460
  %566 = vst.msk [vmem:[%s2 + $0x128] sm:$0xff] %vm528, %v465
  %567 = vst.msk [vmem:[%s2 + $0x130] sm:$0xff] %vm528, %v470
  %568 = vst.msk [vmem:[%s2 + $0x138] sm:$0xff] %vm528, %v475
  %569 = vst.msk [vmem:[%s2 + $0x140] sm:$0xff] %vm528, %v480
  %570 = vst.msk [vmem:[%s2 + $0x148] sm:$0xff] %vm528, %v485
  %571 = vst.msk [vmem:[%s2 + $0x150] sm:$0xff] %vm528, %v490
  %572 = vst.msk [vmem:[%s2 + $0x158] sm:$0xff] %vm528, %v495
  %573 = vst.msk [vmem:[%s2 + $0x160] sm:$0xff] %vm528, %v500
  %574 = vst.msk [vmem:[%s2 + $0x168] sm:$0xff] %vm528, %v505
  %575 = vst.msk [vmem:[%s2 + $0x170] sm:$0xff] %vm528, %v510
  %576 = vst.msk [vmem:[%s2 + $0x178] sm:$0xff] %vm528, %v515
  %577 = vst.msk [vmem:[%s2 + $0x180] sm:$0xff] %vm528, %v520
  %578 = vst.msk [vmem:[%s2 + $0x188] sm:$0xff] %vm528, %v525
  // Predicated region
  $region10: #{tpu_custom_call.1} parent=0 // pred_check
    _
  $region11: #{tpu_custom_call.1} parent=0 // pred_check_branch
    %580 = sbr.rel (0) target = $region13
  $region12: #{tpu_custom_call.1} parent=0 // pred_region
    _
  $region13: #{tpu_custom_call.1} parent=0 // pred_fallthru
    _
  // Predicated region
  $region14: #{tpu_custom_call.1} parent=0 // pred_check
    _
  $region15: #{tpu_custom_call.1} parent=0 // pred_check_branch
    %582 = sbr.rel (0) target = $region17
  $region16: #{tpu_custom_call.1} parent=0 // pred_region
    _
  $region17: #{tpu_custom_call.1} parent=0 // pred_fallthru
    _

</llo_original>
